<compile_context>
chip_gen: v6e
topology: v6e:2x2x1
jax: 0.10.0
libtpu: 0.0.40
codegen_flags: <defaults>
</compile_context>

<pallas_src>
import functools

import jax
import jax.numpy as jnp
from jax.experimental import pallas as pl
from jax.experimental.pallas import tpu as pltpu


def _vmem_limit_bytes():
    cap = 64 * 1024 * 1024          # conservative default (v7x physical VMEM)
    try:
        cap = int(pltpu.get_tpu_info().vmem_capacity_bytes)
    except Exception:
        pass
    # leave headroom for Mosaic-internal scratch; 112 MiB on v5e/v6e, 48 MiB on v7x
    return int(min(max(cap - 16 * 1024 * 1024, 32 * 1024 * 1024), 112 * 1024 * 1024))


_VMEM_LIMIT = _vmem_limit_bytes()


def _mosaic_params(*dimension_semantics):
    return pltpu.CompilerParams(dimension_semantics=dimension_semantics,
                                vmem_limit_bytes=_VMEM_LIMIT)


def _fit(dim, target, align=128):
    """Largest tile <= target that evenly divides dim, preferring 128-aligned tiles.

    Real LLaMA dims (4096 / 11008 / 14336 / ...) hit an aligned divisor (e.g. 11008 ->
    256); tiny test shapes fall back to a single full-size block (always legal: a block
    equal to the full dim satisfies the (8, 128) rule)."""
    if dim <= target:
        return dim
    if dim % target == 0:
        return target
    t = (target // align) * align
    while t >= align:
        if dim % t == 0:
            return t
        t -= align
    return dim


# ---------------- RMSNorm (+ residual add), token-tiled ----------------
def _rmsnorm_kernel(x_ref, w_ref, normed_ref, *, eps):
    x = x_ref[...].astype(jnp.float32)
    var = jnp.mean(x * x, axis=-1, keepdims=True)
    normed = x * jax.lax.rsqrt(var + eps)
    normed_ref[...] = (w_ref[...].astype(jnp.float32) * normed).astype(normed_ref.dtype)


def _rmsnorm_add_kernel(x_ref, r_ref, w_ref, normed_ref, res_ref, *, eps):
    x = x_ref[...].astype(jnp.float32) + r_ref[...].astype(jnp.float32)
    res_ref[...] = x.astype(res_ref.dtype)
    var = jnp.mean(x * x, axis=-1, keepdims=True)
    normed = x * jax.lax.rsqrt(var + eps)
    normed_ref[...] = (w_ref[...].astype(jnp.float32) * normed).astype(normed_ref.dtype)


def rmsnorm(x, residual, weight, eps, tm=128):
    T, hidden = x.shape
    tm = _fit(T, tm)
    w2d = weight.reshape(1, hidden)
    x_spec = pl.BlockSpec((tm, hidden), lambda i: (i, 0))
    w_spec = pl.BlockSpec((1, hidden), lambda i: (0, 0))
    if residual is None:
        # no-residual variant: single output, the residual is just the input array
        normed = pl.pallas_call(
            functools.partial(_rmsnorm_kernel, eps=eps),
            out_shape=jax.ShapeDtypeStruct(x.shape, x.dtype),
            grid=(T // tm,),
            in_specs=[x_spec, w_spec],
            out_specs=x_spec,
            compiler_params=_mosaic_params("parallel"),
        )(x, w2d)
        return normed, x
    normed, res = pl.pallas_call(
        functools.partial(_rmsnorm_add_kernel, eps=eps),
        out_shape=(jax.ShapeDtypeStruct(x.shape, x.dtype),
                   jax.ShapeDtypeStruct(x.shape, x.dtype)),
        grid=(T // tm,),
        in_specs=[x_spec, x_spec, w_spec],
        out_specs=(x_spec, x_spec),
        compiler_params=_mosaic_params("parallel"),
    )(x, residual, w2d)
    return normed, res


# ---------------- tiled dense matmul (QKV / o_proj / down projections) ----------------
def _matmul_kernel(x_ref, w_ref, o_ref, acc_ref):
    @pl.when(pl.program_id(2) == 0)
    def _():
        acc_ref[...] = jnp.zeros_like(acc_ref)

    acc_ref[...] += jnp.dot(x_ref[...], w_ref[...], preferred_element_type=jnp.float32)

    @pl.when(pl.program_id(2) == pl.num_programs(2) - 1)
    def _():
        o_ref[...] = acc_ref[...].astype(o_ref.dtype)


def matmul(x, w, *, tm=512, tn=512, tk=512):
    M, K = x.shape
    _, N = w.shape
    tm, tn, tk = _fit(M, tm), _fit(N, tn), _fit(K, tk)
    return pl.pallas_call(
        _matmul_kernel,
        out_shape=jax.ShapeDtypeStruct((M, N), x.dtype),
        grid=(M // tm, N // tn, K // tk),
        in_specs=[pl.BlockSpec((tm, tk), lambda i, j, k: (i, k)),
                  pl.BlockSpec((tk, tn), lambda i, j, k: (k, j))],
        out_specs=pl.BlockSpec((tm, tn), lambda i, j, k: (i, j)),
        scratch_shapes=[pltpu.VMEM((tm, tn), jnp.float32)],
        compiler_params=_mosaic_params("parallel", "parallel", "arbitrary"),
    )(x, w)


# -------- fused RoPE (rotate-half / neox) + in-place KV cache write --------
def _rope_kv_kernel(qkv_ref, cos_ref, sin_ref, past_ref, q_ref, cache_ref,
                    *, num_heads, num_kv_heads, scale):
    del past_ref  # aliased with cache_ref; prefill fully overwrites it, never read
    H, KVH = num_heads, num_kv_heads
    D = qkv_ref.shape[-1]
    half = D // 2
    c = cos_ref[...].astype(jnp.float32)       # (tm, 1, half) -- broadcast over heads
    s = sin_ref[...].astype(jnp.float32)

    # q heads: rotate-half, with the softmax scale folded in (saves a (tq, tk) VPU
    # multiply per attention block downstream).
    q1 = qkv_ref[:, :H, :half].astype(jnp.float32)
    q2 = qkv_ref[:, :H, half:].astype(jnp.float32)
    cs, ss = c * scale, s * scale
    q_ref[..., :half] = (q1 * cs - q2 * ss).astype(q_ref.dtype)
    q_ref[..., half:] = (q1 * ss + q2 * cs).astype(q_ref.dtype)

    # k heads: rotate-half (unscaled), written straight into the KV cache
    k1 = qkv_ref[:, H:H + KVH, :half].astype(jnp.float32)
    k2 = qkv_ref[:, H:H + KVH, half:].astype(jnp.float32)
    cache_ref[:, 0, :, :half] = (k1 * c - k2 * s).astype(cache_ref.dtype)
    cache_ref[:, 0, :, half:] = (k1 * s + k2 * c).astype(cache_ref.dtype)

    # v heads: plain copy into the KV cache (never rotated)
    cache_ref[:, 1, :, :] = qkv_ref[:, H + KVH:, :].astype(cache_ref.dtype)


def rope_and_kv_cache(qkv3, cos, sin, layer_past, *, num_heads, num_kv_heads,
                      softmax_scale, tm=128):
    T, HT, D = qkv3.shape
    H, KVH = num_heads, num_kv_heads
    half = D // 2
    tm = _fit(T, tm)
    cos3 = cos.reshape(T, 1, half)             # free reshape, no HxT blow-up
    sin3 = sin.reshape(T, 1, half)
    kernel = functools.partial(_rope_kv_kernel, num_heads=H, num_kv_heads=KVH,
                               scale=softmax_scale)
    q_rot, cache = pl.pallas_call(
        kernel,
        out_shape=(jax.ShapeDtypeStruct((T, H, D), qkv3.dtype),
                   jax.ShapeDtypeStruct(layer_past.shape, layer_past.dtype)),
        grid=(T // tm,),
        in_specs=[pl.BlockSpec((tm, HT, D), lambda i: (i, 0, 0)),
                  pl.BlockSpec((tm, 1, half), lambda i: (i, 0, 0)),
                  pl.BlockSpec((tm, 1, half), lambda i: (i, 0, 0)),
                  # aliased KV cache: never read -> keep it in HBM, no DMA in
                  pl.BlockSpec(memory_space=pl.ANY)],
        out_specs=(pl.BlockSpec((tm, H, D), lambda i: (i, 0, 0)),
                   pl.BlockSpec((tm, 2, KVH, D), lambda i: (i, 0, 0, 0))),
        input_output_aliases={3: 1},           # write kv in place into layer_past
        compiler_params=_mosaic_params("parallel"),
    )(qkv3, cos3, sin3, layer_past)
    return q_rot, cache


# ---------------- flash-style varlen causal attention (GQA via index_map) ----------------
def _flash_attn_kernel(segq_ref, segk_ref, q_ref, k_ref, v_ref, o_ref,
                       m_sc, l_sc, acc_sc, *, tq, tk):
    qi = pl.program_id(1)
    ki = pl.program_id(2)

    @pl.when(ki == 0)
    def _():
        m_sc[...] = jnp.full_like(m_sc, -1e30)
        l_sc[...] = jnp.zeros_like(l_sc)
        acc_sc[...] = jnp.zeros_like(acc_sc)

    # Causal block skip: KV blocks strictly above the diagonal contribute nothing.
    # (Their DMAs are also elided because the kv index_map clamps to the diagonal block.)
    @pl.when(ki * tk < (qi + 1) * tq)
    def _():
        q = q_ref[...]                                        # (tq, D), native dtype,
        k = k_ref[...]                                        # q already carries scale
        v = v_ref[...]
        s = jax.lax.dot_general(q, k, (((1,), (1,)), ((), ())),
                                preferred_element_type=jnp.float32)
        row = qi * tq + jax.lax.broadcasted_iota(jnp.int32, (tq, tk), 0)
        col = ki * tk + jax.lax.broadcasted_iota(jnp.int32, (tq, tk), 1)
        mask = (col <= row) & (segq_ref[...] == segk_ref[...])  # causal + same-sequence
        m_prev = m_sc[...]
        m_cur = jnp.max(jnp.where(mask, s, -1e30), axis=-1, keepdims=True)
        m_new = jnp.maximum(m_prev, m_cur)
        alpha = jnp.exp(m_prev - m_new)
        p = jnp.where(mask, jnp.exp(s - m_new), 0.0)
        l_sc[...] = alpha * l_sc[...] + jnp.sum(p, axis=-1, keepdims=True)
        acc_sc[...] = alpha * acc_sc[...] + jnp.dot(p.astype(v.dtype), v,
                                                    preferred_element_type=jnp.float32)
        m_sc[...] = m_new

    @pl.when(ki == pl.num_programs(2) - 1)
    def _():
        o_ref[...] = (acc_sc[...] * pl.reciprocal(l_sc[...], approx=True)).astype(o_ref.dtype)


def _attn_tile_and_pad(T, target):
    """Pick the attention tile and the padded token count."""
    if T <= target:
        return T, T                      # single full-extent block is always legal
    for t in (target, 128):
        if T % t == 0:
            return t, T
    Tp = ((T + target - 1) // target) * target
    return target, Tp


def flash_varlen_attention(q2, kv2, seg_ids, *, num_heads, num_kv_heads, head_size,
                           block=256):
    # q2:  [T, H*D]        token-major, RoPE'd and pre-scaled q
    # kv2: [T, 2*KVH*D]    token-major view of the KV cache (k heads then v heads)
    T = q2.shape[0]
    H, KVH, D = num_heads, num_kv_heads, head_size
    group = H // KVH
    tile, Tp = _attn_tile_and_pad(T, block)
    tq = tk = tile
    if Tp != T:
        pad = Tp - T
        q2 = jnp.pad(q2, ((0, pad), (0, 0)))
        kv2 = jnp.pad(kv2, ((0, pad), (0, 0)))
        # padded tokens get their own segment id -> never mix with real tokens
        seg_ids = jnp.pad(seg_ids, (0, pad), constant_values=2 ** 30)
    nq, nk = Tp // tq, Tp // tk
    seg_col = seg_ids.reshape(Tp, 1).astype(jnp.int32)
    seg_row = seg_ids.reshape(1, Tp).astype(jnp.int32)

    def kv_block(qi, ki):
        # Clamp above-diagonal kv blocks to the diagonal block: skipped (masked) grid
        # steps reuse the already-fetched block and issue no new DMA.
        return jnp.minimum(ki, ((qi + 1) * tq - 1) // tk)

    kernel = functools.partial(_flash_attn_kernel, tq=tq, tk=tk)
    out = pl.pallas_call(
        kernel,
        out_shape=jax.ShapeDtypeStruct((Tp, H * D), q2.dtype),
        grid=(H, nq, nk),
        in_specs=[
            pl.BlockSpec((tq, 1), lambda h, qi, ki: (qi, 0)),
            pl.BlockSpec((1, tk), lambda h, qi, ki: (0, kv_block(qi, ki))),
            # q head h, kv head h // group -- GQA handled purely by the index_map
            pl.BlockSpec((tq, D), lambda h, qi, ki: (qi, h)),
            pl.BlockSpec((tk, D), lambda h, qi, ki: (kv_block(qi, ki), h // group)),
            pl.BlockSpec((tk, D), lambda h, qi, ki: (kv_block(qi, ki), KVH + h // group)),
        ],
        out_specs=pl.BlockSpec((tq, D), lambda h, qi, ki: (qi, h)),
        scratch_shapes=[pltpu.VMEM((tq, 1), jnp.float32),
                        pltpu.VMEM((tq, 1), jnp.float32),
                        pltpu.VMEM((tq, D), jnp.float32)],
        compiler_params=_mosaic_params("parallel", "parallel", "arbitrary"),
    )(seg_col, seg_row, q2, kv2, kv2)
    return out[:T] if Tp != T else out


# -------- fused gate/up matmuls + SwiGLU epilogue (no [T, 2*I] round trip) --------
def _gate_up_swiglu_kernel(x_ref, wg_ref, wu_ref, o_ref, accg_ref, accu_ref):
    k = pl.program_id(2)

    @pl.when(k == 0)
    def _():
        accg_ref[...] = jnp.zeros_like(accg_ref)
        accu_ref[...] = jnp.zeros_like(accu_ref)

    x = x_ref[...]
    accg_ref[...] += jnp.dot(x, wg_ref[...], preferred_element_type=jnp.float32)
    accu_ref[...] += jnp.dot(x, wu_ref[...], preferred_element_type=jnp.float32)

    @pl.when(k == pl.num_programs(2) - 1)
    def _():
        g = accg_ref[...]
        u = accu_ref[...]
        o_ref[...] = (g * jax.nn.sigmoid(g) * u).astype(o_ref.dtype)


def gate_up_swiglu(x, w_gate, w_up, *, tm=512, tn=512, tk=512):
    T, K = x.shape
    inter = w_gate.shape[1]
    tm, tn, tk = _fit(T, tm), _fit(inter, tn), _fit(K, tk)
    return pl.pallas_call(
        _gate_up_swiglu_kernel,
        out_shape=jax.ShapeDtypeStruct((T, inter), x.dtype),
        grid=(T // tm, inter // tn, K // tk),
        in_specs=[pl.BlockSpec((tm, tk), lambda i, j, k: (i, k)),
                  pl.BlockSpec((tk, tn), lambda i, j, k: (k, j)),
                  pl.BlockSpec((tk, tn), lambda i, j, k: (k, j))],
        out_specs=pl.BlockSpec((tm, tn), lambda i, j, k: (i, j)),
        scratch_shapes=[pltpu.VMEM((tm, tn), jnp.float32),
                        pltpu.VMEM((tm, tn), jnp.float32)],
        compiler_params=_mosaic_params("parallel", "parallel", "arbitrary"),
    )(x, w_gate, w_up)


# ---------------- FlashLlamaLayer.forward ----------------
def flash_llama_layer(params, hidden_states, residual, cos, sin, cu_seqlens,
                      max_s, layer_past, layer_past_present_indices, cu_seqlens_q,
                      *, num_heads, num_kv_heads, head_size, rms_eps):
    H, KVH, D = num_heads, num_kv_heads, head_size
    assert H % KVH == 0, "num_heads must be a multiple of num_kv_heads (GQA)"
    HT = H + 2 * KVH
    T, hidden = hidden_states.shape

    # input_layernorm (+ residual add)
    normed, res = rmsnorm(hidden_states, residual, params["input_ln_w"], rms_eps)

    # fused QKV projection (tiled, MXU-pipelined)
    qkv = matmul(normed, params["wqkv"])               # [T, (H + 2*KVH) * D]
    qkv3 = qkv.reshape(T, HT, D)                       # free reshape

    if layer_past_present_indices is not None:
        # TODO(synk): decode path (scatter kv at layer_past_present_indices and attend
        # against the full cache) is not implemented; only the prefill path is.
        raise NotImplementedError("decode path not implemented")

    softmax_scale = float(D) ** -0.5

    # Fused RoPE + KV-cache write:
    #   q_rot:          [T, H, D]     rotated and pre-scaled q
    #   new_layer_past: [T, 2, KVH, D] rotated k + raw v, written in place (aliased)
    q_rot, new_layer_past = rope_and_kv_cache(
        qkv3, cos, sin, layer_past,
        num_heads=H, num_kv_heads=KVH, softmax_scale=softmax_scale)

    # per-token sequence id from cu_seqlens (varlen causal mask)
    seg_ids = jnp.cumsum(jnp.zeros((T,), jnp.int32).at[cu_seqlens[1:-1]].add(1))

    # attention: token-major 2-D views, head selected purely via BlockSpec index_maps
    attn = flash_varlen_attention(q_rot.reshape(T, H * D),
                                  new_layer_past.reshape(T, 2 * KVH * D),
                                  seg_ids, num_heads=H, num_kv_heads=KVH, head_size=D)

    # o_proj: plain tiled matmul over the token-major [T, H*D] attention output
    attn_output = matmul(attn, params["wo"])            # [T, hidden]

    # post_attention_layernorm (+ residual add)
    normed2, attn_res = rmsnorm(attn_output, res, params["post_ln_w"], rms_eps)

    # MLP: fused gate/up matmul + SwiGLU epilogue, then down projection.
    inter = params["w_down"].shape[0]
    # NOTE: weights split once here; in a real server they are pre-split at load time.
    w_gate = params["w_gate_up"][:, :inter]
    w_up = params["w_gate_up"][:, inter:]
    act = gate_up_swiglu(normed2, w_gate, w_up)          # [T, inter]
    mlp_output = matmul(act, params["w_down"])           # [T, hidden]

    return mlp_output, attn_res, new_layer_past


# ---------------- pure-JAX reference (for correctness check) ----------------
def _ref_flash_llama_layer(params, hidden_states, residual, cos, sin, cu_seqlens,
                           *, num_heads, num_kv_heads, head_size, rms_eps):
    H, KVH, D = num_heads, num_kv_heads, head_size
    T, _ = hidden_states.shape

    def rms(x, w):
        var = jnp.mean(x * x, axis=-1, keepdims=True)
        return w * x * jax.lax.rsqrt(var + rms_eps)

    x = hidden_states if residual is None else hidden_states + residual
    res = x
    normed = rms(x, params["input_ln_w"])
    qkv3 = (normed @ params["wqkv"]).reshape(T, H + 2 * KVH, D)

    half = D // 2

    def rope(t):
        x1, x2 = t[..., :half], t[..., half:]
        c, s = cos[:, None, :], sin[:, None, :]
        return jnp.concatenate([x1 * c - x2 * s, x1 * s + x2 * c], axis=-1)

    q = rope(qkv3[:, :H])
    k = rope(qkv3[:, H:H + KVH])
    v = qkv3[:, H + KVH:]
    cache = jnp.stack([k, v], axis=1)

    group = H // KVH
    k_full = jnp.repeat(k, group, axis=1)
    v_full = jnp.repeat(v, group, axis=1)
    seg_ids = jnp.cumsum(jnp.zeros((T,), jnp.int32).at[cu_seqlens[1:-1]].add(1))
    scores = jnp.einsum("qhd,khd->hqk", q, k_full) * (float(D) ** -0.5)
    row = jnp.arange(T)[:, None]
    col = jnp.arange(T)[None, :]
    mask = (col <= row) & (seg_ids[:, None] == seg_ids[None, :])
    scores = jnp.where(mask[None], scores, -1e30)
    p = jax.nn.softmax(scores, axis=-1)
    attn = jnp.einsum("hqk,khd->qhd", p, v_full).reshape(T, H * D)
    attn_output = attn @ params["wo"]

    attn_res = attn_output + res
    normed2 = rms(attn_res, params["post_ln_w"])
    inter = params["w_down"].shape[0]
    gu = normed2 @ params["w_gate_up"]
    g, u = gu[:, :inter], gu[:, inter:]
    mlp_output = (g * jax.nn.sigmoid(g) * u) @ params["w_down"]
    return mlp_output, attn_res, cache


if __name__ == "__main__":
    key = jax.random.PRNGKey(0)

    # small config consistent with the module (GQA: 2 query heads per kv head).
    # head_size = 128 so attention BlockSpecs are lane-width blocks, as in real LLaMA.
    T = 8                  # total tokens: sequences of length 5 and 3
    H = 4
    KVH = 2
    D = 128                # head_size
    hidden = H * D         # 512
    inter = 256
    rope_theta = 10000.0
    rms_eps = 1e-6

    ks = jax.random.split(key, 8)
    wstd = 0.04
    params = {
        "input_ln_w": 1.0 + 0.01 * jax.random.normal(ks[0], (hidden,), jnp.float32),
        "wqkv":       wstd * jax.random.normal(ks[1], (hidden, (H + 2 * KVH) * D), jnp.float32),
        "wo":         wstd * jax.random.normal(ks[2], (H * D, hidden), jnp.float32),
        "post_ln_w":  1.0 + 0.01 * jax.random.normal(ks[3], (hidden,), jnp.float32),
        "w_gate_up":  wstd * jax.random.normal(ks[4], (hidden, 2 * inter), jnp.float32),
        "w_down":     wstd * jax.random.normal(ks[5], (inter, hidden), jnp.float32),
    }

    hidden_states = jax.random.normal(ks[6], (T, hidden), jnp.float32)
    residual = None                                 # first layer: residual is None

    seq_lens = (5, 3)
    cu_seqlens = jnp.array([0, 5, 8], dtype=jnp.int32)
    cu_seqlens_q = None
    max_s = max(seq_lens)

    # rotary cos/sin (per-token within-sequence positions), shape [T, D//2]
    positions = jnp.concatenate([jnp.arange(l, dtype=jnp.float32) for l in seq_lens])
    inv_freq = 1.0 / (rope_theta ** (jnp.arange(0, D, 2, dtype=jnp.float32) / D))
    freqs = positions[:, None] * inv_freq[None, :]
    cos = jnp.cos(freqs)
    sin = jnp.sin(freqs)

    layer_past = jnp.zeros((T, 2, KVH, D), jnp.float32)   # prefill kv-cache slot
    layer_past_present_indices = None                     # prefill path

    layer = functools.partial(flash_llama_layer, num_heads=H, num_kv_heads=KVH,
                              head_size=D, rms_eps=rms_eps)

    mlp_output, attn_res, new_layer_past = layer(
        params, hidden_states, residual, cos, sin, cu_seqlens, max_s,
        layer_past, layer_past_present_indices, cu_seqlens_q)
    jax.block_until_ready((mlp_output, attn_res, new_layer_past))

    ref_mlp, ref_res, ref_cache = _ref_flash_llama_layer(
        params, hidden_states, residual, cos, sin, cu_seqlens,
        num_heads=H, num_kv_heads=KVH, head_size=D, rms_eps=rms_eps)

    assert mlp_output.shape == (T, hidden)
    assert attn_res.shape == (T, hidden)
    assert new_layer_past.shape == (T, 2, KVH, D)
    assert bool(jnp.all(jnp.isfinite(mlp_output)))
    assert bool(jnp.allclose(mlp_output, ref_mlp, rtol=5e-2, atol=5e-2)), \
        f"mlp max abs diff {float(jnp.max(jnp.abs(mlp_output - ref_mlp)))}"
    assert bool(jnp.allclose(attn_res, ref_res, rtol=5e-2, atol=5e-2)), \
        f"residual max abs diff {float(jnp.max(jnp.abs(attn_res - ref_res)))}"
    assert bool(jnp.allclose(new_layer_past, ref_cache, rtol=5e-2, atol=5e-2)), \
        f"kv cache max abs diff {float(jnp.max(jnp.abs(new_layer_past - ref_cache)))}"
    print("KERNEL_OK")
</pallas_src>

<mosaic_0001>
module attributes {stable_mosaic.version = 11 : i64} {
  func.func @_rmsnorm_kernel(%arg0: i32, %arg1: memref<8x512xf32, #tpu.memory_space<vmem>>, %arg2: memref<1x512xf32, #tpu.memory_space<vmem>>, %arg3: memref<8x512xf32, #tpu.memory_space<vmem>>) attributes {dimension_semantics = [#tpu.dimension_semantics<parallel>], iteration_bounds = array<i64: 1>, scalar_prefetch = 0 : i64, scratch_operands = 0 : i64, tpu.core_type = #tpu.core_type<tc>, window_params = [{transform_indices = @transform_0, window_bounds = array<i64: 8, 512>}, {pipeline_mode = #tpu.pipeline_mode<synchronous>, transform_indices = @transform_1, window_bounds = array<i64: 1, 512>}, {transform_indices = @transform_2, window_bounds = array<i64: 8, 512>}]} {
    %c0 = arith.constant 0 : index
    %c0_0 = arith.constant 0 : index
    %0 = vector.load %arg1[%c0, %c0_0] : memref<8x512xf32, #tpu.memory_space<vmem>>, vector<8x512xf32>
    %1 = arith.mulf %0, %0 : vector<8x512xf32>
    %cst = arith.constant dense<0.000000e+00> : vector<8xf32>
    %2 = vector.multi_reduction <add>, %1, %cst [1] : vector<8x512xf32> to vector<8xf32>
    %3 = vector.shape_cast %2 : vector<8xf32> to vector<8x1xf32>
    %cst_1 = arith.constant 5.120000e+02 : f32
    %4 = vector.broadcast %cst_1 : f32 to vector<8x1xf32>
    %5 = arith.divf %3, %4 : vector<8x1xf32>
    %cst_2 = arith.constant 9.99999997E-7 : f32
    %6 = vector.broadcast %cst_2 : f32 to vector<8x1xf32>
    %7 = arith.addf %5, %6 : vector<8x1xf32>
    %8 = math.rsqrt %7 : vector<8x1xf32>
    %9 = vector.broadcast %8 : vector<8x1xf32> to vector<8x512xf32>
    %10 = arith.mulf %0, %9 : vector<8x512xf32>
    %c0_3 = arith.constant 0 : index
    %c0_4 = arith.constant 0 : index
    %11 = vector.load %arg2[%c0_3, %c0_4] : memref<1x512xf32, #tpu.memory_space<vmem>>, vector<1x512xf32>
    %12 = vector.broadcast %11 : vector<1x512xf32> to vector<8x512xf32>
    %13 = arith.mulf %12, %10 : vector<8x512xf32>
    %c0_5 = arith.constant 0 : index
    %c0_6 = arith.constant 0 : index
    %14 = vector.load %arg3[%c0_5, %c0_6] : memref<8x512xf32, #tpu.memory_space<vmem>>, vector<8x512xf32>
    tpu.vector_store %arg3[%c0_5, %c0_6], %13 {strides = array<i32>} : memref<8x512xf32, #tpu.memory_space<vmem>>, vector<8x512xf32>,
    return
  }
  func.func @transform_0(%arg0: i32) -> (i32, i32) {
    %c0_i32 = arith.constant 0 : i32
    %c0_i32_0 = arith.constant 0 : i32
    return %arg0, %c0_i32 : i32, i32
  }
  func.func @transform_1(%arg0: i32) -> (i32, i32) {
    %c0_i32 = arith.constant 0 : i32
    %c0_i32_0 = arith.constant 0 : i32
    %c0_i32_1 = arith.constant 0 : i32
    return %c0_i32, %c0_i32_0 : i32, i32
  }
  func.func @transform_2(%arg0: i32) -> (i32, i32) {
    %c0_i32 = arith.constant 0 : i32
    %c0_i32_0 = arith.constant 0 : i32
    return %arg0, %c0_i32 : i32, i32
  }
}

</mosaic_0001>

<llo_original>
// kernel: tpu_custom_call.1
$region0: #{tpu_custom_call.1}
  #allocation0 [shape = 'u32[]', space=smem, size = 0x4, offset = 0x4, fixed_abs, tag = 'smem constant byte address 0x4 - core index']
  #allocation1 [shape = 'u32[144,128]{1,0:T(1,128)}', space=vmem, size = 0x12000, scoped, tag = 'internal scratch']
  %s0 = inlined_call_operand.hbm [shape: f32[8,512], index: 0, kind: input, shape index: {}]
  %s1 = inlined_call_operand.hbm [shape: f32[1,512], index: 1, kind: input, shape index: {}]
  %s2 = inlined_call_operand.hbm [shape: f32[8,512], index: 2, kind: output, shape index: {}]
  %s3 = sld [smem:[#allocation0]]
  $region26: #{tpu_custom_call.1} parent=0
    _
  %s5 = ssub.s32 1, %s3
  %s6 = scalar_select 0, %s5, %s3
  $region1: #{tpu_custom_call.1} parent=0
    #allocation2 [shape = 'u8[16384]{0}', space=vmem, size = 0x4000, scoped, tag = 'input window, operand 0, single buffered']
    #allocation3 [shape = 's32[1]{0}', space=sflag, size = 0x4, scoped, tag = 'scoped memory for tpu_custom_call.1']
    #allocation4 [shape = 's32[1]{0}', space=sflag, size = 0x4, scoped, tag = 'scoped memory for tpu_custom_call.1']
    #allocation5 [shape = 'u8[2048]{0}', space=vmem, size = 0x800, scoped, tag = 'input window, operand 1, single buffered']
    #allocation6 [shape = 's32[1]{0}', space=sflag, size = 0x4, scoped, tag = 'scoped memory for tpu_custom_call.1']
    #allocation7 [shape = 'u8[16384]{0}', space=vmem, size = 0x4000, scoped, tag = 'output window, operand 0, single buffered']
    %7 = vsyncpa [#allocation3], 0
    %8 = vsyncpa [#allocation6], 0
    %9 = vsyncpa [#allocation4], 0
    // Predicated region
    $region2: #{tpu_custom_call.1} parent=1 // pred_check
      _
    $region3: #{tpu_custom_call.1} parent=1 // pred_check_branch
      %11 = sbr.rel (0) target = $region5
    $region4: #{tpu_custom_call.1} parent=1 // pred_region
      %s13 = ssub.s32 512, 512
      %14 = vsyncadd [#allocation3], %s13
      %s16 = sshll.u32 [#allocation2], 4
      %s17 = int_to_ptr.vmem [resolvable:$true] %s16
      %19 = dma.hbm_to_vmem [thread:$0]  %s0, 512, %s17, [#allocation3]
    $region5: #{tpu_custom_call.1} parent=1 // pred_fallthru
      _
    // Predicated region
    $region6: #{tpu_custom_call.1} parent=1 // pred_check
      _
    $region7: #{tpu_custom_call.1} parent=1 // pred_check_branch
      %21 = sbr.rel (0) target = $region9
    $region8: #{tpu_custom_call.1} parent=1 // pred_region
      %s23 = ssub.s32 64, 64
      %24 = vsyncadd [#allocation6], %s23
      %s26 = sshll.u32 [#allocation5], 4
      %s27 = int_to_ptr.vmem [resolvable:$true] %s26
      %29 = dma.hbm_to_vmem [thread:$0]  %s1, 64, %s27, [#allocation6]
    $region9: #{tpu_custom_call.1} parent=1 // pred_fallthru
      _
    // Predicated region
    $region10: #{tpu_custom_call.1} parent=1 // pred_check
      _
    $region11: #{tpu_custom_call.1} parent=1 // pred_check_branch
      %31 = sbr.rel (0) target = $region13
    $region12: #{tpu_custom_call.1} parent=1 // pred_region
      %32 = dma.done [#allocation3], 512
    $region13: #{tpu_custom_call.1} parent=1 // pred_fallthru
      _
    // Predicated region
    $region14: #{tpu_custom_call.1} parent=1 // pred_check
      _
    $region15: #{tpu_custom_call.1} parent=1 // pred_check_branch
      %34 = sbr.rel (0) target = $region17
    $region16: #{tpu_custom_call.1} parent=1 // pred_region
      %35 = dma.done [#allocation6], 64
    $region17: #{tpu_custom_call.1} parent=1 // pred_fallthru
      _
    %v36 = vld [vmem:[#allocation2] sm:$0xff]
    %v37 = vld [vmem:[#allocation2 + $0x8] sm:$0xff]
    %v38 = vld [vmem:[#allocation2 + $0x10] sm:$0xff]
    %v39 = vld [vmem:[#allocation2 + $0x18] sm:$0xff]
    %v40 = vmul.f32 %v36, %v36
    %v41 = vmul.f32 %v37, %v37
    %v42 = vmul.f32 %v38, %v38
    %v43 = vmul.f32 %v39, %v39
    %v44 = vadd.f32 %v40, %v41
    %v45 = vadd.f32 %v44, %v42
    %v46 = vadd.f32 %v45, %v43
    %47 = vadd.xlane.f32.xlu0 %v46
    %v48 = vpop.xlane.xlu0 %47
    %v49 = vrcp.pop 512.0
    %v50 = vmul.f32 %v48, %v49
    %v51 = vadd.f32 %v50, 1e-06
    %v52 = vrsqrt.pop %v51
    %v53 = vmul.f32 %v36, %v52
    %v54 = vmul.f32 %v37, %v52
    %v55 = vmul.f32 %v38, %v52
    %v56 = vmul.f32 %v39, %v52
    %v57 = vld [vmem:[#allocation5] sm:$0xf]
    %v59 = vlaneseq
    %v60 = vshrl.u32 %v59, 7
    %v61 = vsub.s32 0, %v60
    %v62 = vrot.slane %v57, %v61
    %v63 = vlaneseq
    %v64 = vshrl.u32 %v63, 7
    %v65 = vsub.s32 1, %v64
    %v66 = vrot.slane %v57, %v65
    %v67 = vlaneseq
    %v68 = vshrl.u32 %v67, 7
    %v69 = vsub.s32 2, %v68
    %v70 = vrot.slane %v57, %v69
    %v71 = vlaneseq
    %v72 = vshrl.u32 %v71, 7
    %v73 = vsub.s32 3, %v72
    %v74 = vrot.slane %v57, %v73
    %v79 = vmul.f32 %v62, %v53
    %v80 = vmul.f32 %v66, %v54
    %v81 = vmul.f32 %v70, %v55
    %v82 = vmul.f32 %v74, %v56
    %83 = vst [vmem:[#allocation7] sm:$0xff] %v79
    %84 = vst [vmem:[#allocation7 + $0x8] sm:$0xff] %v80
    %85 = vst [vmem:[#allocation7 + $0x10] sm:$0xff] %v81
    %86 = vst [vmem:[#allocation7 + $0x18] sm:$0xff] %v82
    // Predicated region
    $region18: #{tpu_custom_call.1} parent=1 // pred_check
      _
    $region19: #{tpu_custom_call.1} parent=1 // pred_check_branch
      %88 = sbr.rel (0) target = $region21
    $region20: #{tpu_custom_call.1} parent=1 // pred_region
      %s90 = ssub.s32 512, 512
      %91 = vsyncadd [#allocation4], %s90
      %s93 = sshll.u32 [#allocation7], 4
      %s94 = int_to_ptr.vmem [resolvable:$true] %s93
      %96 = dma.vmem_to_hbm [thread:$0]  %s94, 512, %s2, [#allocation4]
    $region21: #{tpu_custom_call.1} parent=1 // pred_fallthru
      _
    // Predicated region
    $region22: #{tpu_custom_call.1} parent=1 // pred_check
      _
    $region23: #{tpu_custom_call.1} parent=1 // pred_check_branch
      %98 = sbr.rel (0) target = $region25
    $region24: #{tpu_custom_call.1} parent=1 // pred_region
      %99 = dma.done [#allocation4], 512
    $region25: #{tpu_custom_call.1} parent=1 // pred_fallthru
      _
    %100 = vsyncpa [#allocation3], 1
    %101 = vsyncpa [#allocation6], 1
    %102 = vsyncpa [#allocation4], 1

</llo_original>
